<compile_context>
chip_gen: v7x
topology: tpu7x:2x2x1
jax: 0.10.0
libtpu: 0.0.40
codegen_flags: <defaults>
</compile_context>

<pallas_src>
import jax
import jax.numpy as jnp
from jax.experimental import pallas as pl
from jax.experimental.pallas import tpu as pltpu

_LANE = 128
_TARGET_BLOCK_BYTES = 4 * 1024 * 1024   # ~4 MiB per VMEM buffer
_MIN_GRID_STEPS = 4                     # keep >= 4 steps so v7x dual-TC shards
_VMEM_LIMIT_BYTES = 32 * 1024 * 1024    # 2 in + 2 out ~4 MiB buffers fit easily


def _scale_kernel(scale_ref, x_ref, o_ref):
    # scale_ref: (1, 1) f32 in SMEM; x_ref / o_ref: (block_rows, 128) VMEM tiles.
    o_ref[...] = (x_ref[...] * scale_ref[0, 0]).astype(o_ref.dtype)


def _round_up(a, b):
    return ((a + b - 1) // b) * b


def _pick_block_rows(rows, itemsize):
    """Row-tile: ~4 MiB per buffer, multiple of the dtype's sublane tile,
    while keeping >= _MIN_GRID_STEPS grid steps for medium/large inputs."""
    sub = max(8, 8 * (4 // itemsize))    # 8 (f32) / 16 (bf16,f16) / 32 (int8)
    if rows <= sub * _MIN_GRID_STEPS:
        return rows                      # tiny input: one full-extent block
    target = max(sub, (_TARGET_BLOCK_BYTES // (_LANE * itemsize)) // sub * sub)
    br = min(target, pl.cdiv(rows, _MIN_GRID_STEPS))
    return max(sub, _round_up(br, sub))


def scale_forward(x, scale):
    """Pallas TPU equivalent of `Scale.forward`: x * scale (scale shape (1,))."""
    scale_f32 = jnp.asarray(scale, jnp.float32).reshape(-1)[:1]

    # torch promotes int * float-parameter to float; float inputs stay in
    # their native dtype (no extra up/down-cast HBM passes for bf16/f16).
    out_dtype = x.dtype if jnp.issubdtype(x.dtype, jnp.floating) else jnp.float32
    xc = x.astype(out_dtype)

    orig_shape = x.shape
    n = xc.size
    if n == 0:
        return (xc * scale_f32[0]).astype(out_dtype)

    itemsize = jnp.dtype(out_dtype).itemsize
    xf = jnp.ravel(xc)                   # free (bitcast) for contiguous input

    padded = (n % _LANE) != 0
    if padded:
        # TODO(synk): mask the ragged tail in-kernel instead of this pad/slice
        # pass (only taken when the element count is not a multiple of 128).
        xf = jnp.pad(xf, (0, _round_up(n, _LANE) - n))
    rows = xf.size // _LANE
    x2 = xf.reshape(rows, _LANE)         # lane-dense slab: unmasked vld/vst

    block_rows = _pick_block_rows(rows, itemsize)
    grid = (pl.cdiv(rows, block_rows),)  # ragged last block handled by Pallas

    scale_smem = scale_f32.reshape(1, 1)

    out2 = pl.pallas_call(
        _scale_kernel,
        out_shape=jax.ShapeDtypeStruct((rows, _LANE), out_dtype),
        grid=grid,
        in_specs=[
            pl.BlockSpec(memory_space=pltpu.MemorySpace.SMEM),       # scale
            pl.BlockSpec((block_rows, _LANE), lambda i: (i, 0)),     # x tile
        ],
        out_specs=pl.BlockSpec((block_rows, _LANE), lambda i: (i, 0)),
        compiler_params=pltpu.CompilerParams(
            dimension_semantics=("parallel",),
            vmem_limit_bytes=_VMEM_LIMIT_BYTES),
    )(scale_smem, x2)

    if padded:
        out = out2.reshape(-1)[:n].reshape(orig_shape)
    else:
        out = out2.reshape(orig_shape)
    return out


if __name__ == "__main__":
    key = jax.random.PRNGKey(0)

    # nn.Parameter(torch.FloatTensor([0.001]))
    scale = jnp.array([0.001], jnp.float32)

    # Primary example: small f32 feature map (2, 4, 16, 16), 128-aligned size.
    x = jax.random.normal(key, (2, 4, 16, 16), jnp.float32)
    out = jax.block_until_ready(scale_forward(x, scale))
    ref = x * scale[0]
    assert out.shape == x.shape and out.dtype == x.dtype
    assert jnp.allclose(out, ref, rtol=1e-6, atol=1e-6), \
        float(jnp.max(jnp.abs(out - ref)))

    # Secondary check: bf16 input with a ragged (non-128-multiple) size,
    # exercising the native-dtype path and the padded tail path.
    k1, k2 = jax.random.split(key)
    xb = jax.random.normal(k1, (3, 5, 7), jnp.float32).astype(jnp.bfloat16)
    outb = jax.block_until_ready(scale_forward(xb, scale))
    refb = (xb.astype(jnp.float32) * scale[0]).astype(jnp.bfloat16)
    assert outb.shape == xb.shape and outb.dtype == jnp.bfloat16
    assert jnp.allclose(outb.astype(jnp.float32), refb.astype(jnp.float32),
                        rtol=1e-2, atol=1e-3)

    # Tertiary check: multi-step grid with a ragged last block (f32).
    xr = jax.random.normal(k2, (5, 300, 97), jnp.float32)
    outr = jax.block_until_ready(scale_forward(xr, scale))
    refr = xr * scale[0]
    assert outr.shape == xr.shape
    assert jnp.allclose(outr, refr, rtol=1e-6, atol=1e-6), \
        float(jnp.max(jnp.abs(outr - refr)))

    print("KERNEL_OK")
</pallas_src>

<mosaic_0001>
module attributes {stable_mosaic.version = 11 : i64} {
  func.func @_scale_kernel(%arg0: i32, %arg1: memref<1x1xf32, #tpu.memory_space<smem>>, %arg2: memref<16x128xf32, #tpu.memory_space<vmem>>, %arg3: memref<16x128xf32, #tpu.memory_space<vmem>>) attributes {dimension_semantics = [#tpu.dimension_semantics<parallel>], iteration_bounds = array<i64: 1>, scalar_prefetch = 0 : i64, scratch_operands = 0 : i64, tpu.core_type = #tpu.core_type<tc>, window_params = [{transform_indices = @transform_0, window_bounds = array<i64: 1, 1>}, {transform_indices = @transform_1, window_bounds = array<i64: 16, 128>}, {transform_indices = @transform_2, window_bounds = array<i64: 16, 128>}]} {
    %c0 = arith.constant 0 : index
    %c0_0 = arith.constant 0 : index
    %0 = vector.load %arg2[%c0, %c0_0] : memref<16x128xf32, #tpu.memory_space<vmem>>, vector<16x128xf32>
    %c0_1 = arith.constant 0 : index
    %c0_2 = arith.constant 0 : index
    %1 = memref.load %arg1[%c0_1, %c0_2] : memref<1x1xf32, #tpu.memory_space<smem>>
    %2 = vector.broadcast %1 : f32 to vector<16x128xf32>
    %3 = arith.mulf %0, %2 : vector<16x128xf32>
    %c0_3 = arith.constant 0 : index
    %c0_4 = arith.constant 0 : index
    %4 = vector.load %arg3[%c0_3, %c0_4] : memref<16x128xf32, #tpu.memory_space<vmem>>, vector<16x128xf32>
    tpu.vector_store %arg3[%c0_3, %c0_4], %3 {strides = array<i32>} : memref<16x128xf32, #tpu.memory_space<vmem>>, vector<16x128xf32>,
    return
  }
  func.func @transform_0(%arg0: i32) -> (i32, i32) {
    %c0_i32 = arith.constant 0 : i32
    %c0_i32_0 = arith.constant 0 : i32
    %c0_i32_1 = arith.constant 0 : i32
    return %c0_i32, %c0_i32_0 : i32, i32
  }
  func.func @transform_1(%arg0: i32) -> (i32, i32) {
    %c0_i32 = arith.constant 0 : i32
    %c0_i32_0 = arith.constant 0 : i32
    return %arg0, %c0_i32 : i32, i32
  }
  func.func @transform_2(%arg0: i32) -> (i32, i32) {
    %c0_i32 = arith.constant 0 : i32
    %c0_i32_0 = arith.constant 0 : i32
    return %arg0, %c0_i32 : i32, i32
  }
}

</mosaic_0001>

<llo_original>
// kernel: tpu_custom_call.1
$region0: #{tpu_custom_call.1}
  #allocation0 [shape = 'u32[]', space=smem, size = 0x4, offset = 0x4, fixed_abs, tag = 'smem constant byte address 0x4 - core index']
  #allocation1 [shape = 'u32[144,128]{1,0:T(1,128)}', space=vmem, size = 0x12000, scoped, tag = 'internal scratch']
  #allocation2 [shape = 'f32[1,1]{1,0:T(1,128)S(6)}', space=smem, size = 0x200, scoped, tag = 'scoped memory for tpu_custom_call.1']
  %s0 = inlined_call_operand.<no memory space> [shape: f32[1,1], index: 0, kind: input, shape index: {}]
  %s1 = inlined_call_operand.hbm [shape: f32[16,128], index: 1, kind: input, shape index: {}]
  %s2 = inlined_call_operand.hbm [shape: f32[16,128], index: 2, kind: output, shape index: {}]
  %s3 = sld [smem:[#allocation0]]
  $region22: #{tpu_custom_call.1} parent=0
    _
  %s5 = ssub.s32 1, %s3
  %s6 = scalar_select 0, %s5, %s3
  %7 = sst [smem:[#allocation2]] %s0
  $region1: #{tpu_custom_call.1} parent=0
    #allocation3 [shape = 'u8[8192]{0}', space=vmem, size = 0x2000, scoped, tag = 'input window, operand 1, single buffered']
    #allocation4 [shape = 's32[1]{0}', space=sflag, size = 0x4, scoped, tag = 'scoped memory for tpu_custom_call.1']
    #allocation5 [shape = 's32[1]{0}', space=sflag, size = 0x4, scoped, tag = 'scoped memory for tpu_custom_call.1']
    #allocation6 [shape = 'u8[8192]{0}', space=vmem, size = 0x2000, scoped, tag = 'output window, operand 0, single buffered']
    %8 = vsyncpa [#allocation4], 0
    %9 = vsyncpa [#allocation5], 0
    // Predicated region
    $region2: #{tpu_custom_call.1} parent=1 // pred_check
      _
    $region3: #{tpu_custom_call.1} parent=1 // pred_check_branch
      %11 = sbr.rel (0) target = $region5
    $region4: #{tpu_custom_call.1} parent=1 // pred_region
      _
    $region5: #{tpu_custom_call.1} parent=1 // pred_fallthru
      _
    // Predicated region
    $region6: #{tpu_custom_call.1} parent=1 // pred_check
      _
    $region7: #{tpu_custom_call.1} parent=1 // pred_check_branch
      %13 = sbr.rel (0) target = $region9
    $region8: #{tpu_custom_call.1} parent=1 // pred_region
      %s15 = ssub.s32 256, 256
      %16 = vsyncadd [#allocation4], %s15
      %s17 = sshll.u32 [#allocation3], 4
      %s18 = int_to_ptr.vmem [resolvable:$true] %s17
      %23 = dma.hbm_to_vmem [thread:$0]  %s1, 256, %s18, [#allocation4], 128, 128, 8
    $region9: #{tpu_custom_call.1} parent=1 // pred_fallthru
      _
    // Predicated region
    $region10: #{tpu_custom_call.1} parent=1 // pred_check
      _
    $region11: #{tpu_custom_call.1} parent=1 // pred_check_branch
      %25 = sbr.rel (0) target = $region13
    $region12: #{tpu_custom_call.1} parent=1 // pred_region
      %26 = dma.done [#allocation4], 256
    $region13: #{tpu_custom_call.1} parent=1 // pred_fallthru
      _
    %v27 = vld [vmem:[#allocation3] sm:$0xff]
    %v28 = vld [vmem:[#allocation3 + $0x8] sm:$0xff]
    %s29 = sld [smem:[#allocation2]]
    %v30 = vstv %s29
    %v31 = vmul.f32 %v27, %v30
    %v32 = vmul.f32 %v28, %v30
    %33 = vst [vmem:[#allocation6] sm:$0xff] %v31
    %34 = vst [vmem:[#allocation6 + $0x8] sm:$0xff] %v32
    // Predicated region
    $region14: #{tpu_custom_call.1} parent=1 // pred_check
      _
    $region15: #{tpu_custom_call.1} parent=1 // pred_check_branch
      %36 = sbr.rel (0) target = $region17
    $region16: #{tpu_custom_call.1} parent=1 // pred_region
      %s38 = ssub.s32 256, 256
      %39 = vsyncadd [#allocation5], %s38
      %s40 = sshll.u32 [#allocation6], 4
      %s41 = int_to_ptr.vmem [resolvable:$true] %s40
      %46 = dma.vmem_to_hbm [thread:$0]  %s41, 256, %s2, [#allocation5], 128, 128, 8
    $region17: #{tpu_custom_call.1} parent=1 // pred_fallthru
      _
    // Predicated region
    $region18: #{tpu_custom_call.1} parent=1 // pred_check
      _
    $region19: #{tpu_custom_call.1} parent=1 // pred_check_branch
      %48 = sbr.rel (0) target = $region21
    $region20: #{tpu_custom_call.1} parent=1 // pred_region
      %49 = dma.done [#allocation5], 256
    $region21: #{tpu_custom_call.1} parent=1 // pred_fallthru
      _
    %50 = vsyncpa [#allocation4], 1
    %51 = vsyncpa [#allocation5], 1

</llo_original>
